<compile_context>
chip_gen: v7x
topology: tpu7x:2x2x1
jax: 0.10.0
libtpu: 0.0.40
codegen_flags: <defaults>
</compile_context>

<pallas_src>
import functools

import jax
import jax.numpy as jnp
from jax.experimental import pallas as pl
from jax.experimental.pallas import tpu as pltpu


def _cdiv(a, b):
    return (a + b - 1) // b


def _round_up(x, m):
    return ((x + m - 1) // m) * m


# Flipped to False at runtime if pl.Buffered(1) is not supported by the
# installed jax's pallas_call lowering.
_SINGLE_BUFFER_WEIGHTS = hasattr(pl, "Buffered")


def _gelu_new(x):
    # HF "gelu_new" (tanh approximation); f32 math (EUP tanh + VPU mul/add).
    c = jnp.float32(0.7978845608028654)  # sqrt(2/pi)
    return 0.5 * x * (1.0 + jnp.tanh(c * (x + 0.044715 * (x * x * x))))


def _adapter_kernel(x_ref, wd_ref, bd_ref, wu_ref, bu_ref, o_ref):
    # Fused: down-project -> gelu_new -> up-project; z never touches HBM.
    x = x_ref[...].astype(wd_ref.dtype)                       # bf16 MXU operand
    z = jnp.dot(x, wd_ref[...], preferred_element_type=jnp.float32)
    z = _gelu_new(z + bd_ref[...])                            # f32 bias + f32 gelu
    out = jnp.dot(z.astype(wu_ref.dtype), wu_ref[...],
                  preferred_element_type=jnp.float32)
    o_ref[...] = (out + bu_ref[...]).astype(o_ref.dtype)      # f32 bias, single cast


def _const_spec(shape, single_buffer):
    """BlockSpec for an operand whose block index never changes across the grid."""
    index_map = lambda i: (0, 0)
    if single_buffer:
        # Constant block: one VMEM buffer is enough (Pallas skips the re-DMA
        # for unchanged block indices anyway); halves weight VMEM residency.
        return pl.BlockSpec(shape, index_map, pipeline_mode=pl.Buffered(1))
    return pl.BlockSpec(shape, index_map)


def _vmem_budget_bytes():
    # ~85% of physical per-core VMEM (64 MiB on v7x, 128 MiB on v5e/v6e):
    # leaves headroom for compiler scratch / MXU staging.
    cap = 64 << 20  # conservative fallback = v7x
    try:
        cap = int(getattr(pltpu.get_tpu_info(), "vmem_capacity_bytes", cap))
    except Exception:
        pass
    return int(cap * 0.85)


def _vmem_need_bytes(bt, D, d, io_itemsize, w_itemsize):
    act_in = 2 * bt * D * io_itemsize                 # double-buffered x tiles
    act_out = 2 * bt * D * io_itemsize                # double-buffered out tiles
    weights = 2 * D * d * w_itemsize + (D + d) * 4    # single-buffered H's + f32 biases
    interm = bt * d * 4 + bt * D * 4 + bt * D * w_itemsize   # z, f32 out, casted x
    return act_in + act_out + weights + interm


def _pick_tile(T, D, d, requested, io_itemsize, w_itemsize):
    budget = _vmem_budget_bytes()
    requested = max(32, int(requested))
    steps = _cdiv(T, requested)
    if steps == 1 and T >= 128:
        steps = 2              # grid >= 2 so both v7x TensorCores get work
    if steps > 1 and steps % 2:
        steps += 1             # even step count -> balanced 2-way TC split
    bt = min(_round_up(_cdiv(T, steps), 32), _round_up(T, 32))
    if bt >= T:
        bt = T                 # single full-extent block: always layout-legal
    # Shrink the tile (not just the limit) if it would overflow the VMEM budget.
    while bt > 32 and _vmem_need_bytes(bt, D, d, io_itemsize, w_itemsize) > budget:
        bt = _round_up(bt // 2, 32)
    need = _vmem_need_bytes(bt, D, d, io_itemsize, w_itemsize)
    vmem_limit = int(min(max(int(need * 1.3) + (2 << 20), 16 << 20), budget))
    return bt, vmem_limit


@functools.partial(
    jax.jit,
    static_argnames=("bt", "vmem_limit", "out_dtype", "single_buffer_weights"))
def _adapter_call(x2, wd, bd, wu, bu, *, bt, vmem_limit, out_dtype,
                  single_buffer_weights):
    T, D = x2.shape
    d = wd.shape[1]
    grid = _cdiv(T, bt)

    cost = pl.CostEstimate(
        flops=4 * T * D * d,                      # two matmuls
        transcendentals=T * d,                    # tanh in gelu_new
        bytes_accessed=(x2.size * x2.dtype.itemsize
                        + T * D * jnp.dtype(out_dtype).itemsize
                        + wd.size * wd.dtype.itemsize
                        + wu.size * wu.dtype.itemsize
                        + bd.size * bd.dtype.itemsize
                        + bu.size * bu.dtype.itemsize),
    )

    return pl.pallas_call(
        _adapter_kernel,
        out_shape=jax.ShapeDtypeStruct((T, D), out_dtype),
        grid_spec=pl.GridSpec(
            grid=(grid,),
            in_specs=[
                pl.BlockSpec((bt, D), lambda i: (i, 0)),            # x tile (streamed)
                _const_spec((D, d), single_buffer_weights),         # H_down
                _const_spec((1, d), single_buffer_weights),         # b_down (f32)
                _const_spec((d, D), single_buffer_weights),         # H_up
                _const_spec((1, D), single_buffer_weights),         # b_up (f32)
            ],
            out_specs=pl.BlockSpec((bt, D), lambda i: (i, 0)),
        ),
        compiler_params=pltpu.CompilerParams(
            dimension_semantics=("parallel",),
            vmem_limit_bytes=vmem_limit),
        cost_estimate=cost,
    )(x2, wd, bd, wu, bu)


def _maybe_cast(a, dtype):
    return a if a.dtype == dtype else a.astype(dtype)


def hypercomplex_adapter(x, w_down, b_down, w_up, b_up, *,
                         block_tokens=1024,
                         io_dtype=None,
                         compute_dtype=jnp.bfloat16):
    """Fused PHM adapter forward: gelu_new(x @ H_down + b_down) @ H_up + b_up.

    x: (B, S, D); w_down (=H_down): (D, d); w_up (=H_up): (d, D); biases (1, dim).
    io_dtype:      dtype of x/out HBM traffic (default x.dtype). Pass
                   jnp.bfloat16 on bandwidth-starved parts (esp. v5e).
    compute_dtype: MXU operand dtype (default bfloat16, f32 accumulation).
                   Pass jnp.float32 for bit-faithful f32 matmuls.
    """
    global _SINGLE_BUFFER_WEIGHTS
    B, S, D = x.shape
    T = B * S
    d = w_down.shape[1]
    io_dtype = jnp.dtype(io_dtype if io_dtype is not None else x.dtype)
    compute_dtype = jnp.dtype(compute_dtype)

    # Weights to the MXU operand dtype (cache these casts if calling per layer
    # in a loop); biases stay f32 (tiny; keeps the adds exact).
    wd = _maybe_cast(w_down, compute_dtype)
    wu = _maybe_cast(w_up, compute_dtype)
    bd = _maybe_cast(b_down, jnp.float32)
    bu = _maybe_cast(b_up, jnp.float32)
    x2 = _maybe_cast(x.reshape(T, D), io_dtype)   # no padding: free reshape only

    bt, vmem_limit = _pick_tile(T, D, d, block_tokens,
                                io_dtype.itemsize, compute_dtype.itemsize)
    kwargs = dict(bt=bt, vmem_limit=vmem_limit, out_dtype=io_dtype)

    if _SINGLE_BUFFER_WEIGHTS:
        try:
            out = _adapter_call(x2, wd, bd, wu, bu,
                                single_buffer_weights=True, **kwargs)
        except Exception:
            # jax build without Buffered(1) support in pallas_call lowering:
            # fall back to default double-buffered constant blocks.
            _SINGLE_BUFFER_WEIGHTS = False
            out = _adapter_call(x2, wd, bd, wu, bu,
                                single_buffer_weights=False, **kwargs)
    else:
        out = _adapter_call(x2, wd, bd, wu, bu,
                            single_buffer_weights=False, **kwargs)
    return out.reshape(B, S, D)


# ----------------------- parameter construction (glue) -----------------------
# The kron build runs once at parameter-init time (hoisted out of the per-call
# path), so the bandwidth-bound kernel never re-materializes H_down/H_up.

def make_phm_weight(phm_rule, W):
    """H = sum_i kron(phm_rule[i], W[i]).

    phm_rule: (n, n, n), W: (n, in/n, out/n)  ->  H: (in, out)
    kron(A, B)[a*p + i, b*q + j] = A[a, b] * B[i, j]
    """
    n, a, b = phm_rule.shape
    _, p, q = W.shape
    H = jnp.einsum('nab,npq->apbq', phm_rule, W).reshape(a * p, b * q)
    return H


def init_phm_linear(key, in_features, out_features, phm_dim, phm_init_range=0.01):
    """Deterministic init mirroring PHMLinear(c_init='normal', w_init='glorot-uniform',
    factorized_phm=False, kronecker_prod=False default path, bias=True -> zeros)."""
    k_rule, k_w = jax.random.split(key)
    phm_rule = phm_init_range * jax.random.normal(
        k_rule, (phm_dim, phm_dim, phm_dim), dtype=jnp.float32)
    fan_in = in_features // phm_dim
    fan_out = out_features // phm_dim
    limit = jnp.sqrt(6.0 / (fan_in + fan_out))
    W = jax.random.uniform(k_w, (phm_dim, fan_in, fan_out),
                           dtype=jnp.float32, minval=-limit, maxval=limit)
    H = make_phm_weight(phm_rule, W)                 # (in_features, out_features)
    b = jnp.zeros((1, out_features), dtype=jnp.float32)
    return H, b


def reference_adapter(x, w_down, b_down, w_up, b_up):
    z = _gelu_new(x @ w_down + b_down)
    return z @ w_up + b_up


if __name__ == "__main__":
    # config: input_dim=32, reduction_factor=4 -> down_sample_size=8,
    #         hypercomplex_division (phm_dim)=4, non_linearity='gelu_new'
    batch, seq, input_dim = 2, 8, 32
    reduction_factor = 4
    phm_dim = 4
    down_dim = input_dim // reduction_factor

    key = jax.random.PRNGKey(0)
    kx, kd, ku = jax.random.split(key, 3)

    x = jax.random.normal(kx, (batch, seq, input_dim), dtype=jnp.float32)
    w_down, b_down = init_phm_linear(kd, input_dim, down_dim, phm_dim)
    w_up, b_up = init_phm_linear(ku, down_dim, input_dim, phm_dim)

    # TODO(synk): gradient_clip branch (torch.nn.utils.clip_grad_norm_ on the
    # phm_rule parameters) is a training-time gradient op with no effect on the
    # forward output; not representable in a forward Pallas kernel.

    ref = reference_adapter(x.reshape(-1, input_dim), w_down, b_down, w_up, b_up)
    ref = ref.reshape(batch, seq, input_dim)

    # Default path: f32 I/O, bf16 MXU operands, f32 accumulation.
    out = jax.block_until_ready(hypercomplex_adapter(x, w_down, b_down, w_up, b_up))
    assert out.shape == (batch, seq, input_dim)
    assert jnp.allclose(out, ref, atol=1e-3, rtol=5e-2), \
        float(jnp.max(jnp.abs(out - ref)))

    # Full-f32 compute path: tight check of the fused kernel structure.
    out_f32 = jax.block_until_ready(
        hypercomplex_adapter(x, w_down, b_down, w_up, b_up,
                             compute_dtype=jnp.float32))
    assert jnp.allclose(out_f32, ref, atol=1e-5, rtol=1e-5), \
        float(jnp.max(jnp.abs(out_f32 - ref)))

    # bf16 I/O path (halves x/out HBM traffic; recommended on v5e).
    out_bf16 = jax.block_until_ready(
        hypercomplex_adapter(x, w_down, b_down, w_up, b_up,
                             io_dtype=jnp.bfloat16))
    assert out_bf16.dtype == jnp.bfloat16
    assert jnp.allclose(out_bf16.astype(jnp.float32), ref, atol=2e-3, rtol=5e-2)

    print("KERNEL_OK")
</pallas_src>

<mosaic_0001>
module attributes {stable_mosaic.version = 11 : i64} {
  func.func @_adapter_kernel(%arg0: i32, %arg1: memref<16x32xf32, #tpu.memory_space<vmem>>, %arg2: memref<32x8xbf16, #tpu.memory_space<vmem>>, %arg3: memref<1x8xf32, #tpu.memory_space<vmem>>, %arg4: memref<8x32xbf16, #tpu.memory_space<vmem>>, %arg5: memref<1x32xf32, #tpu.memory_space<vmem>>, %arg6: memref<16x32xf32, #tpu.memory_space<vmem>>) attributes {dimension_semantics = [#tpu.dimension_semantics<parallel>], iteration_bounds = array<i64: 1>, scalar_prefetch = 0 : i64, scratch_operands = 0 : i64, tpu.core_type = #tpu.core_type<tc>, window_params = [{transform_indices = @transform_0, window_bounds = array<i64: 16, 32>}, {pipeline_mode = #tpu.pipeline_mode<synchronous>, transform_indices = @transform_1, window_bounds = array<i64: 32, 8>}, {pipeline_mode = #tpu.pipeline_mode<synchronous>, transform_indices = @transform_2, window_bounds = array<i64: 1, 8>}, {pipeline_mode = #tpu.pipeline_mode<synchronous>, transform_indices = @transform_3, window_bounds = array<i64: 8, 32>}, {pipeline_mode = #tpu.pipeline_mode<synchronous>, transform_indices = @transform_4, window_bounds = array<i64: 1, 32>}, {transform_indices = @transform_5, window_bounds = array<i64: 16, 32>}]} {
    %c0 = arith.constant 0 : index
    %c0_0 = arith.constant 0 : index
    %0 = vector.load %arg1[%c0, %c0_0] : memref<16x32xf32, #tpu.memory_space<vmem>>, vector<16x32xf32>
    %1 = arith.truncf %0 : vector<16x32xf32> to vector<16x32xbf16>
    %c0_1 = arith.constant 0 : index
    %c0_2 = arith.constant 0 : index
    %2 = vector.load %arg2[%c0_1, %c0_2] : memref<32x8xbf16, #tpu.memory_space<vmem>>, vector<32x8xbf16>
    %cst = arith.constant dense<0.000000e+00> : vector<16x8xf32>
    %3 = tpu.matmul %1, %2, %cst {dimension_numbers = #tpu.dot_dimension_numbers<[1], [0], [0], [1], [0, 0, 1, 1], [], []>} : vector<16x32xbf16>, vector<32x8xbf16>, vector<16x8xf32> -> vector<16x8xf32>
    %c0_3 = arith.constant 0 : index
    %c0_4 = arith.constant 0 : index
    %4 = vector.load %arg3[%c0_3, %c0_4] : memref<1x8xf32, #tpu.memory_space<vmem>>, vector<1x8xf32>
    %5 = vector.broadcast %4 : vector<1x8xf32> to vector<16x8xf32>
    %6 = arith.addf %3, %5 : vector<16x8xf32>
    %cst_5 = arith.constant 5.000000e-01 : f32
    %7 = vector.broadcast %cst_5 : f32 to vector<16x8xf32>
    %8 = arith.mulf %7, %6 : vector<16x8xf32>
    %9 = arith.mulf %6, %6 : vector<16x8xf32>
    %10 = arith.mulf %9, %6 : vector<16x8xf32>
    %cst_6 = arith.constant 4.471500e-02 : f32
    %11 = vector.broadcast %cst_6 : f32 to vector<16x8xf32>
    %12 = arith.mulf %11, %10 : vector<16x8xf32>
    %13 = arith.addf %6, %12 : vector<16x8xf32>
    %cst_7 = arith.constant 0.797884583 : f32
    %14 = vector.broadcast %cst_7 : f32 to vector<16x8xf32>
    %15 = arith.mulf %14, %13 : vector<16x8xf32>
    %16 = math.tanh %15 : vector<16x8xf32>
    %cst_8 = arith.constant 1.000000e+00 : f32
    %17 = vector.broadcast %cst_8 : f32 to vector<16x8xf32>
    %18 = arith.addf %17, %16 : vector<16x8xf32>
    %19 = arith.mulf %8, %18 : vector<16x8xf32>
    %20 = arith.truncf %19 : vector<16x8xf32> to vector<16x8xbf16>
    %c0_9 = arith.constant 0 : index
    %c0_10 = arith.constant 0 : index
    %21 = vector.load %arg4[%c0_9, %c0_10] : memref<8x32xbf16, #tpu.memory_space<vmem>>, vector<8x32xbf16>
    %cst_11 = arith.constant dense<0.000000e+00> : vector<16x32xf32>
    %22 = tpu.matmul %20, %21, %cst_11 {dimension_numbers = #tpu.dot_dimension_numbers<[1], [0], [0], [1], [0, 0, 1, 1], [], []>} : vector<16x8xbf16>, vector<8x32xbf16>, vector<16x32xf32> -> vector<16x32xf32>
    %c0_12 = arith.constant 0 : index
    %c0_13 = arith.constant 0 : index
    %23 = vector.load %arg5[%c0_12, %c0_13] : memref<1x32xf32, #tpu.memory_space<vmem>>, vector<1x32xf32>
    %24 = vector.broadcast %23 : vector<1x32xf32> to vector<16x32xf32>
    %25 = arith.addf %22, %24 : vector<16x32xf32>
    %c0_14 = arith.constant 0 : index
    %c0_15 = arith.constant 0 : index
    %26 = vector.load %arg6[%c0_14, %c0_15] : memref<16x32xf32, #tpu.memory_space<vmem>>, vector<16x32xf32>
    tpu.vector_store %arg6[%c0_14, %c0_15], %25 {strides = array<i32>} : memref<16x32xf32, #tpu.memory_space<vmem>>, vector<16x32xf32>,
    return
  }
  func.func @transform_0(%arg0: i32) -> (i32, i32) {
    %c0_i32 = arith.constant 0 : i32
    %c0_i32_0 = arith.constant 0 : i32
    return %arg0, %c0_i32 : i32, i32
  }
  func.func @transform_1(%arg0: i32) -> (i32, i32) {
    %c0_i32 = arith.constant 0 : i32
    %c0_i32_0 = arith.constant 0 : i32
    %c0_i32_1 = arith.constant 0 : i32
    return %c0_i32, %c0_i32_0 : i32, i32
  }
  func.func @transform_2(%arg0: i32) -> (i32, i32) {
    %c0_i32 = arith.constant 0 : i32
    %c0_i32_0 = arith.constant 0 : i32
    %c0_i32_1 = arith.constant 0 : i32
    return %c0_i32, %c0_i32_0 : i32, i32
  }
  func.func @transform_3(%arg0: i32) -> (i32, i32) {
    %c0_i32 = arith.constant 0 : i32
    %c0_i32_0 = arith.constant 0 : i32
    %c0_i32_1 = arith.constant 0 : i32
    return %c0_i32, %c0_i32_0 : i32, i32
  }
  func.func @transform_4(%arg0: i32) -> (i32, i32) {
    %c0_i32 = arith.constant 0 : i32
    %c0_i32_0 = arith.constant 0 : i32
    %c0_i32_1 = arith.constant 0 : i32
    return %c0_i32, %c0_i32_0 : i32, i32
  }
  func.func @transform_5(%arg0: i32) -> (i32, i32) {
    %c0_i32 = arith.constant 0 : i32
    %c0_i32_0 = arith.constant 0 : i32
    return %arg0, %c0_i32 : i32, i32
  }
}

module attributes {stable_mosaic.version = 11 : i64} {
  func.func @_adapter_kernel(%arg0: i32, %arg1: memref<16x32xf32, #tpu.memory_space<vmem>>, %arg2: memref<32x8xbf16, #tpu.memory_space<vmem>>, %arg3: memref<1x8xf32, #tpu.memory_space<vmem>>, %arg4: memref<8x32xbf16, #tpu.memory_space<vmem>>, %arg5: memref<1x32xf32, #tpu.memory_space<vmem>>, %arg6: memref<16x32xf32, #tpu.memory_space<vmem>>) attributes {dimension_semantics = [#tpu.dimension_semantics<parallel>], iteration_bounds = array<i64: 1>, scalar_prefetch = 0 : i64, scratch_operands = 0 : i64, tpu.core_type = #tpu.core_type<tc>, window_params = [{transform_indices = @transform_0, window_bounds = array<i64: 16, 32>}, {pipeline_mode = #tpu.pipeline_mode<synchronous>, transform_indices = @transform_1, window_bounds = array<i64: 32, 8>}, {pipeline_mode = #tpu.pipeline_mode<synchronous>, transform_indices = @transform_2, window_bounds = array<i64: 1, 8>}, {pipeline_mode = #tpu.pipeline_mode<synchronous>, transform_indices = @transform_3, window_bounds = array<i64: 8, 32>}, {pipeline_mode = #tpu.pipeline_mode<synchronous>, transform_indices = @transform_4, window_bounds = array<i64: 1, 32>}, {transform_indices = @transform_5, window_bounds = array<i64: 16, 32>}]} {
    %c0 = arith.constant 0 : index
    %c0_0 = arith.constant 0 : index
    %0 = vector.load %arg1[%c0, %c0_0] : memref<16x32xf32, #tpu.memory_space<vmem>>, vector<16x32xf32>
    %1 = arith.truncf %0 : vector<16x32xf32> to vector<16x32xbf16>
    %c0_1 = arith.constant 0 : index
    %c0_2 = arith.constant 0 : index
    %2 = vector.load %arg2[%c0_1, %c0_2] : memref<32x8xbf16, #tpu.memory_space<vmem>>, vector<32x8xbf16>
    %cst = arith.constant dense<0.000000e+00> : vector<16x8xf32>
    %3 = tpu.matmul %1, %2, %cst {dimension_numbers = #tpu.dot_dimension_numbers<[1], [0], [0], [1], [0, 0, 1, 1], [], []>} : vector<16x32xbf16>, vector<32x8xbf16>, vector<16x8xf32> -> vector<16x8xf32>
    %c0_3 = arith.constant 0 : index
    %c0_4 = arith.constant 0 : index
    %4 = vector.load %arg3[%c0_3, %c0_4] : memref<1x8xf32, #tpu.memory_space<vmem>>, vector<1x8xf32>
    %5 = vector.broadcast %4 : vector<1x8xf32> to vector<16x8xf32>
    %6 = arith.addf %3, %5 : vector<16x8xf32>
    %cst_5 = arith.constant 5.000000e-01 : f32
    %7 = vector.broadcast %cst_5 : f32 to vector<16x8xf32>
    %8 = arith.mulf %7, %6 : vector<16x8xf32>
    %9 = arith.mulf %6, %6 : vector<16x8xf32>
    %10 = arith.mulf %9, %6 : vector<16x8xf32>
    %cst_6 = arith.constant 4.471500e-02 : f32
    %11 = vector.broadcast %cst_6 : f32 to vector<16x8xf32>
    %12 = arith.mulf %11, %10 : vector<16x8xf32>
    %13 = arith.addf %6, %12 : vector<16x8xf32>
    %cst_7 = arith.constant 0.797884583 : f32
    %14 = vector.broadcast %cst_7 : f32 to vector<16x8xf32>
    %15 = arith.mulf %14, %13 : vector<16x8xf32>
    %16 = math.tanh %15 : vector<16x8xf32>
    %cst_8 = arith.constant 1.000000e+00 : f32
    %17 = vector.broadcast %cst_8 : f32 to vector<16x8xf32>
    %18 = arith.addf %17, %16 : vector<16x8xf32>
    %19 = arith.mulf %8, %18 : vector<16x8xf32>
    %20 = arith.truncf %19 : vector<16x8xf32> to vector<16x8xbf16>
    %c0_9 = arith.constant 0 : index
    %c0_10 = arith.constant 0 : index
    %21 = vector.load %arg4[%c0_9, %c0_10] : memref<8x32xbf16, #tpu.memory_space<vmem>>, vector<8x32xbf16>
    %cst_11 = arith.constant dense<0.000000e+00> : vector<16x32xf32>
    %22 = tpu.matmul %20, %21, %cst_11 {dimension_numbers = #tpu.dot_dimension_numbers<[1], [0], [0], [1], [0, 0, 1, 1], [], []>} : vector<16x8xbf16>, vector<8x32xbf16>, vector<16x32xf32> -> vector<16x32xf32>
    %c0_12 = arith.constant 0 : index
    %c0_13 = arith.constant 0 : index
    %23 = vector.load %arg5[%c0_12, %c0_13] : memref<1x32xf32, #tpu.memory_space<vmem>>, vector<1x32xf32>
    %24 = vector.broadcast %23 : vector<1x32xf32> to vector<16x32xf32>
    %25 = arith.addf %22, %24 : vector<16x32xf32>
    %c0_14 = arith.constant 0 : index
    %c0_15 = arith.constant 0 : index
    %26 = vector.load %arg6[%c0_14, %c0_15] : memref<16x32xf32, #tpu.memory_space<vmem>>, vector<16x32xf32>
    tpu.vector_store %arg6[%c0_14, %c0_15], %25 {strides = array<i32>} : memref<16x32xf32, #tpu.memory_space<vmem>>, vector<16x32xf32>,
    return
  }
  func.func @transform_0(%arg0: i32) -> (i32, i32) {
    %c0_i32 = arith.constant 0 : i32
    %c0_i32_0 = arith.constant 0 : i32
    return %arg0, %c0_i32 : i32, i32
  }
  func.func @transform_1(%arg0: i32) -> (i32, i32) {
    %c0_i32 = arith.constant 0 : i32
    %c0_i32_0 = arith.constant 0 : i32
    %c0_i32_1 = arith.constant 0 : i32
    return %c0_i32, %c0_i32_0 : i32, i32
  }
  func.func @transform_2(%arg0: i32) -> (i32, i32) {
    %c0_i32 = arith.constant 0 : i32
    %c0_i32_0 = arith.constant 0 : i32
    %c0_i32_1 = arith.constant 0 : i32
    return %c0_i32, %c0_i32_0 : i32, i32
  }
  func.func @transform_3(%arg0: i32) -> (i32, i32) {
    %c0_i32 = arith.constant 0 : i32
    %c0_i32_0 = arith.constant 0 : i32
    %c0_i32_1 = arith.constant 0 : i32
    return %c0_i32, %c0_i32_0 : i32, i32
  }
  func.func @transform_4(%arg0: i32) -> (i32, i32) {
    %c0_i32 = arith.constant 0 : i32
    %c0_i32_0 = arith.constant 0 : i32
    %c0_i32_1 = arith.constant 0 : i32
    return %c0_i32, %c0_i32_0 : i32, i32
  }
  func.func @transform_5(%arg0: i32) -> (i32, i32) {
    %c0_i32 = arith.constant 0 : i32
    %c0_i32_0 = arith.constant 0 : i32
    return %arg0, %c0_i32 : i32, i32
  }
}

</mosaic_0001>

<llo_original>
// kernel: _adapter_call.1
$region0: #{_adapter_call.1}
  #allocation0 [shape = 'u32[]', space=smem, size = 0x4, offset = 0x4, fixed_abs, tag = 'smem constant byte address 0x4 - core index']
  #allocation1 [shape = 'u32[144,128]{1,0:T(1,128)}', space=vmem, size = 0x12000, scoped, tag = 'internal scratch']
  %s0 = inlined_call_operand.vmem [shape: f32[16,32], index: 0, kind: input, shape index: {}]
  %s1 = inlined_call_operand.vmem [shape: bf16[32,8], index: 1, kind: input, shape index: {}]
  %s2 = inlined_call_operand.vmem [shape: f32[1,8], index: 2, kind: input, shape index: {}]
  %s3 = inlined_call_operand.vmem [shape: bf16[8,32], index: 3, kind: input, shape index: {}]
  %s4 = inlined_call_operand.vmem [shape: f32[1,32], index: 4, kind: input, shape index: {}]
  %s5 = inlined_call_operand.hbm [shape: f32[16,32], index: 5, kind: output, shape index: {}]
  %s6 = sld [smem:[#allocation0]]
  $region30: #{_adapter_call.1} parent=0
    _
  %s8 = ssub.s32 1, %s6
  %s9 = scalar_select 0, %s8, %s6
  $region1: #{_adapter_call.1} parent=0
    #allocation2 [shape = 'u8[8192]{0}', space=vmem, size = 0x2000, scoped, tag = 'output window, operand 0, single buffered']
    #allocation3 [shape = 's32[1]{0}', space=sflag, size = 0x4, scoped, tag = 'scoped memory for _adapter_call.1']
    %10 = vsyncpa [#allocation3], 0
    // Predicated region
    $region2: #{_adapter_call.1} parent=1 // pred_check
      _
    $region3: #{_adapter_call.1} parent=1 // pred_check_branch
      %12 = sbr.rel (0) target = $region5
    $region4: #{_adapter_call.1} parent=1 // pred_region
      _
    $region5: #{_adapter_call.1} parent=1 // pred_fallthru
      _
    // Predicated region
    $region6: #{_adapter_call.1} parent=1 // pred_check
      _
    $region7: #{_adapter_call.1} parent=1 // pred_check_branch
      %14 = sbr.rel (0) target = $region9
    $region8: #{_adapter_call.1} parent=1 // pred_region
      _
    $region9: #{_adapter_call.1} parent=1 // pred_fallthru
      _
    // Predicated region
    $region10: #{_adapter_call.1} parent=1 // pred_check
      _
    $region11: #{_adapter_call.1} parent=1 // pred_check_branch
      %16 = sbr.rel (0) target = $region13
    $region12: #{_adapter_call.1} parent=1 // pred_region
      _
    $region13: #{_adapter_call.1} parent=1 // pred_fallthru
      _
    // Predicated region
    $region14: #{_adapter_call.1} parent=1 // pred_check
      _
    $region15: #{_adapter_call.1} parent=1 // pred_check_branch
      %18 = sbr.rel (0) target = $region17
    $region16: #{_adapter_call.1} parent=1 // pred_region
      _
    $region17: #{_adapter_call.1} parent=1 // pred_fallthru
      _
    // Predicated region
    $region18: #{_adapter_call.1} parent=1 // pred_check
      _
    $region19: #{_adapter_call.1} parent=1 // pred_check_branch
      %20 = sbr.rel (0) target = $region21
    $region20: #{_adapter_call.1} parent=1 // pred_region
      _
    $region21: #{_adapter_call.1} parent=1 // pred_fallthru
      _
    %v22 = vld [vmem:[%s0] sm:$0xff]
    %v23 = vld [vmem:[%s0 + $0x8] sm:$0xff]
    %v24 = vpack.c.bf16 %v23, %v22
    %v25 = vld [vmem:[%s1] sm:$0xf]
    %v26 = vld [vmem:[%s1 + $0x4] sm:$0xf]
    %v27 = vld [vmem:[%s1 + $0x8] sm:$0xf]
    %v28 = vld [vmem:[%s1 + $0xc] sm:$0xf]
    %v29 = vld [vmem:[%s2] sm:$0x1]
    %v31 = vlaneseq
    %v32 = vshrl.u32 %v31, 7
    %v33 = vsub.s32 0, %v32
    %v34 = vrot.slane %v29, %v33
    %v40 = vunpack.c.l.b16 %v25
    %v41 = vunpack.c.l.b16 %v26
    %v42 = vunpack.c.l.b16 %v27
    %v43 = vunpack.c.l.b16 %v28
    %v44 = vpack.c.b16 %v41, %v40
    %v45 = vpack.c.b16 %v43, %v42
    %vm48 = vcmask 261120
    %v50 = vsel %vm48, %v24, 0
    %52 = vmatprep.subr.bf16.mxu0 0
    %53 = vmatpush1.bf16.msra.mxu0 %v44
    %54 = vmatprep.subr.bf16.mxu0 0
    %55 = vmatpush1.bf16.msra.mxu0 %v45
    %56 = vmatprep.subr.bf16.mxu0 0
    %57 = vmatpush1.bf16.msra.mxu0 0
    %58 = vmatprep.subr.bf16.mxu0 0
    %59 = vmatpush1.bf16.msra.mxu0 0
    %60 = vmatprep.subr.bf16.mxu0 0
    %61 = vmatpush1.bf16.msra.mxu0 0
    %62 = vmatprep.subr.bf16.mxu0 0
    %63 = vmatpush1.bf16.msra.mxu0 0
    %64 = vmatprep.subr.bf16.mxu0 0
    %65 = vmatpush1.bf16.msra.mxu0 0
    %66 = vmatprep.subr.bf16.mxu0 0
    %67 = vmatpush1.bf16.msra.mxu0 0
    %68 = vmatprep.subr.bf16.mxu0 0
    %69 = vmatpush1.bf16.msra.mxu0 0
    %70 = vmatprep.subr.bf16.mxu0 0
    %71 = vmatpush1.bf16.msra.mxu0 0
    %72 = vmatprep.subr.bf16.mxu0 0
    %73 = vmatpush1.bf16.msra.mxu0 0
    %74 = vmatprep.subr.bf16.mxu0 0
    %75 = vmatpush1.bf16.msra.mxu0 0
    %76 = vmatprep.subr.bf16.mxu0 0
    %77 = vmatpush1.bf16.msra.mxu0 0
    %78 = vmatprep.subr.bf16.mxu0 0
    %79 = vmatpush1.bf16.msra.mxu0 0
    %80 = vmatprep.subr.bf16.mxu0 0
    %81 = vmatpush1.bf16.msra.mxu0 0
    %82 = vmatprep.subr.bf16.mxu0 0
    %83 = vmatpush1.bf16.msra.mxu0 0
    %84 = vmatprep.mubr.bf16.mxu0 0
    %85 = vmatmul.mubr.bf16.gmra.mrb[0].mxu0 %v50
    %v86 = vpop.f32.mrb[0].mxu0
    %v87 = vadd.f32 %v34, %v86
    %v88 = vpop.f32.mrb[0].mxu0
    %v89 = vpop.f32.mrb[0].mxu0
    %v90 = vadd.f32 %v34, %v89
    %v91 = vpop.f32.mrb[0].mxu0
    %92 = vdwg.mxu0
    %v93 = vmul.f32 %v87, 0.5
    %v94 = vmul.f32 %v90, 0.5
    %v95 = vmul.f32 %v87, %v87
    %v96 = vmul.f32 %v90, %v90
    %v97 = vmul.f32 %v95, %v87
    %v98 = vmul.f32 %v96, %v90
    %v99 = vmul.f32 %v97, 0.044715
    %v100 = vmul.f32 %v98, 0.044715
    %v101 = vadd.f32 %v87, %v99
    %v102 = vadd.f32 %v90, %v100
    %v103 = vmul.f32 %v101, 0.7978846
    %v104 = vmul.f32 %v102, 0.7978846
    %v105 = vtanh.pop %v103
    %v106 = vtanh.pop %v104
    %v107 = vadd.f32 %v105, 1.0
    %v108 = vadd.f32 %v106, 1.0
    %v109 = vmul.f32 %v93, %v107
    %v110 = vmul.f32 %v94, %v108
    %v111 = vpack.c.bf16 %v110, %v109
    %v112 = vld [vmem:[%s3] sm:$0xf]
    %v113 = vld [vmem:[%s4] sm:$0x1]
    %v115 = vlaneseq
    %v116 = vshrl.u32 %v115, 7
    %v117 = vsub.s32 0, %v116
    %v118 = vrot.slane %v113, %v117
    %vm120 = vcmask 64512
    %v122 = vsel %vm120, %v111, 0
    %vm124 = vcmask 1043456
    %v126 = vsel %vm124, %v112, 0
    %128 = vmatprep.subr.bf16.mxu0 0
    %129 = vmatpush1.bf16.msra.mxu0 %v126
    %130 = vmatprep.subr.bf16.mxu0 0
    %131 = vmatpush1.bf16.msra.mxu0 0
    %132 = vmatprep.subr.bf16.mxu0 0
    %133 = vmatpush1.bf16.msra.mxu0 0
    %134 = vmatprep.subr.bf16.mxu0 0
    %135 = vmatpush1.bf16.msra.mxu0 0
    %136 = vmatprep.subr.bf16.mxu0 0
    %137 = vmatpush1.bf16.msra.mxu0 0
    %138 = vmatprep.subr.bf16.mxu0 0
    %139 = vmatpush1.bf16.msra.mxu0 0
    %140 = vmatprep.subr.bf16.mxu0 0
    %141 = vmatpush1.bf16.msra.mxu0 0
    %142 = vmatprep.subr.bf16.mxu0 0
    %143 = vmatpush1.bf16.msra.mxu0 0
    %144 = vmatprep.subr.bf16.mxu0 0
    %145 = vmatpush1.bf16.msra.mxu0 0
    %146 = vmatprep.subr.bf16.mxu0 0
    %147 = vmatpush1.bf16.msra.mxu0 0
    %148 = vmatprep.subr.bf16.mxu0 0
    %149 = vmatpush1.bf16.msra.mxu0 0
    %150 = vmatprep.subr.bf16.mxu0 0
    %151 = vmatpush1.bf16.msra.mxu0 0
    %152 = vmatprep.subr.bf16.mxu0 0
    %153 = vmatpush1.bf16.msra.mxu0 0
    %154 = vmatprep.subr.bf16.mxu0 0
    %155 = vmatpush1.bf16.msra.mxu0 0
    %156 = vmatprep.subr.bf16.mxu0 0
    %157 = vmatpush1.bf16.msra.mxu0 0
    %158 = vmatprep.subr.bf16.mxu0 0
    %159 = vmatpush1.bf16.msra.mxu0 0
    %160 = vmatprep.mubr.bf16.mxu0 0
    %161 = vmatmul.mubr.bf16.gmra.mrb[0].mxu0 %v122
    %v162 = vpop.f32.mrb[0].mxu0
    %v163 = vadd.f32 %v118, %v162
    %v164 = vpop.f32.mrb[0].mxu0
    %v165 = vpop.f32.mrb[0].mxu0
    %v166 = vadd.f32 %v118, %v165
    %v167 = vpop.f32.mrb[0].mxu0
    %168 = vdwg.mxu0
    %169 = vst.msk [vmem:[#allocation2] sm:$0xff] %vm48, %v163
    %170 = vst.msk [vmem:[#allocation2 + $0x8] sm:$0xff] %vm48, %v166
    // Predicated region
    $region22: #{_adapter_call.1} parent=1 // pred_check
      _
    $region23: #{_adapter_call.1} parent=1 // pred_check_branch
      %172 = sbr.rel (0) target = $region25
    $region24: #{_adapter_call.1} parent=1 // pred_region
      %s174 = ssub.s32 256, 256
      %175 = vsyncadd [#allocation3], %s174
      %s176 = sshll.u32 [#allocation2], 4
      %s177 = int_to_ptr.vmem [resolvable:$true] %s176
      %182 = dma.vmem_to_hbm [thread:$0]  %s177, 256, %s5, [#allocation3], 128, 128, 8
    $region25: #{_adapter_call.1} parent=1 // pred_fallthru
      _
    // Predicated region
    $region26: #{_adapter_call.1} parent=1 // pred_check
      _
    $region27: #{_adapter_call.1} parent=1 // pred_check_branch
      %184 = sbr.rel (0) target = $region29
    $region28: #{_adapter_call.1} parent=1 // pred_region
      %185 = dma.done [#allocation3], 256
    $region29: #{_adapter_call.1} parent=1 // pred_fallthru
      _
    %186 = vsyncpa [#allocation3], 1

// kernel: _adapter_call.1
$region0: #{_adapter_call.1}
  #allocation0 [shape = 'u32[]', space=smem, size = 0x4, offset = 0x4, fixed_abs, tag = 'smem constant byte address 0x4 - core index']
  #allocation1 [shape = 'u32[144,128]{1,0:T(1,128)}', space=vmem, size = 0x12000, scoped, tag = 'internal scratch']
  %s0 = inlined_call_operand.vmem [shape: f32[16,32], index: 0, kind: input, shape index: {}]
  %s1 = inlined_call_operand.vmem [shape: bf16[32,8], index: 1, kind: input, shape index: {}]
  %s2 = inlined_call_operand.vmem [shape: f32[1,8], index: 2, kind: input, shape index: {}]
  %s3 = inlined_call_operand.vmem [shape: bf16[8,32], index: 3, kind: input, shape index: {}]
  %s4 = inlined_call_operand.vmem [shape: f32[1,32], index: 4, kind: input, shape index: {}]
  %s5 = inlined_call_operand.hbm [shape: f32[16,32], index: 5, kind: output, shape index: {}]
  %s6 = sld [smem:[#allocation0]]
  $region30: #{_adapter_call.1} parent=0
    _
  %s8 = ssub.s32 1, %s6
  %s9 = scalar_select 0, %s8, %s6
  $region1: #{_adapter_call.1} parent=0
    #allocation2 [shape = 'u8[8192]{0}', space=vmem, size = 0x2000, scoped, tag = 'output window, operand 0, single buffered']
    #allocation3 [shape = 's32[1]{0}', space=sflag, size = 0x4, scoped, tag = 'scoped memory for _adapter_call.1']
    %10 = vsyncpa [#allocation3], 0
    // Predicated region
    $region2: #{_adapter_call.1} parent=1 // pred_check
      _
    $region3: #{_adapter_call.1} parent=1 // pred_check_branch
      %12 = sbr.rel (0) target = $region5
    $region4: #{_adapter_call.1} parent=1 // pred_region
      _
    $region5: #{_adapter_call.1} parent=1 // pred_fallthru
      _
    // Predicated region
    $region6: #{_adapter_call.1} parent=1 // pred_check
      _
    $region7: #{_adapter_call.1} parent=1 // pred_check_branch
      %14 = sbr.rel (0) target = $region9
    $region8: #{_adapter_call.1} parent=1 // pred_region
      _
    $region9: #{_adapter_call.1} parent=1 // pred_fallthru
      _
    // Predicated region
    $region10: #{_adapter_call.1} parent=1 // pred_check
      _
    $region11: #{_adapter_call.1} parent=1 // pred_check_branch
      %16 = sbr.rel (0) target = $region13
    $region12: #{_adapter_call.1} parent=1 // pred_region
      _
    $region13: #{_adapter_call.1} parent=1 // pred_fallthru
      _
    // Predicated region
    $region14: #{_adapter_call.1} parent=1 // pred_check
      _
    $region15: #{_adapter_call.1} parent=1 // pred_check_branch
      %18 = sbr.rel (0) target = $region17
    $region16: #{_adapter_call.1} parent=1 // pred_region
      _
    $region17: #{_adapter_call.1} parent=1 // pred_fallthru
      _
    // Predicated region
    $region18: #{_adapter_call.1} parent=1 // pred_check
      _
    $region19: #{_adapter_call.1} parent=1 // pred_check_branch
      %20 = sbr.rel (0) target = $region21
    $region20: #{_adapter_call.1} parent=1 // pred_region
      _
    $region21: #{_adapter_call.1} parent=1 // pred_fallthru
      _
    %v22 = vld [vmem:[%s0] sm:$0xff]
    %v23 = vld [vmem:[%s0 + $0x8] sm:$0xff]
    %v24 = vpack.c.bf16 %v23, %v22
    %v25 = vld [vmem:[%s1] sm:$0xf]
    %v26 = vld [vmem:[%s1 + $0x4] sm:$0xf]
    %v27 = vld [vmem:[%s1 + $0x8] sm:$0xf]
    %v28 = vld [vmem:[%s1 + $0xc] sm:$0xf]
    %v29 = vld [vmem:[%s2] sm:$0x1]
    %v31 = vlaneseq
    %v32 = vshrl.u32 %v31, 7
    %v33 = vsub.s32 0, %v32
    %v34 = vrot.slane %v29, %v33
    %v40 = vunpack.c.l.b16 %v25
    %v41 = vunpack.c.l.b16 %v26
    %v42 = vunpack.c.l.b16 %v27
    %v43 = vunpack.c.l.b16 %v28
    %v44 = vpack.c.b16 %v41, %v40
    %v45 = vpack.c.b16 %v43, %v42
    %vm48 = vcmask 261120
    %v50 = vsel %vm48, %v24, 0
    %52 = vmatprep.subr.bf16.mxu0 0
    %53 = vmatpush1.bf16.msra.mxu0 %v44
    %54 = vmatprep.subr.bf16.mxu0 0
    %55 = vmatpush1.bf16.msra.mxu0 %v45
    %56 = vmatprep.subr.bf16.mxu0 0
    %57 = vmatpush1.bf16.msra.mxu0 0
    %58 = vmatprep.subr.bf16.mxu0 0
    %59 = vmatpush1.bf16.msra.mxu0 0
    %60 = vmatprep.subr.bf16.mxu0 0
    %61 = vmatpush1.bf16.msra.mxu0 0
    %62 = vmatprep.subr.bf16.mxu0 0
    %63 = vmatpush1.bf16.msra.mxu0 0
    %64 = vmatprep.subr.bf16.mxu0 0
    %65 = vmatpush1.bf16.msra.mxu0 0
    %66 = vmatprep.subr.bf16.mxu0 0
    %67 = vmatpush1.bf16.msra.mxu0 0
    %68 = vmatprep.subr.bf16.mxu0 0
    %69 = vmatpush1.bf16.msra.mxu0 0
    %70 = vmatprep.subr.bf16.mxu0 0
    %71 = vmatpush1.bf16.msra.mxu0 0
    %72 = vmatprep.subr.bf16.mxu0 0
    %73 = vmatpush1.bf16.msra.mxu0 0
    %74 = vmatprep.subr.bf16.mxu0 0
    %75 = vmatpush1.bf16.msra.mxu0 0
    %76 = vmatprep.subr.bf16.mxu0 0
    %77 = vmatpush1.bf16.msra.mxu0 0
    %78 = vmatprep.subr.bf16.mxu0 0
    %79 = vmatpush1.bf16.msra.mxu0 0
    %80 = vmatprep.subr.bf16.mxu0 0
    %81 = vmatpush1.bf16.msra.mxu0 0
    %82 = vmatprep.subr.bf16.mxu0 0
    %83 = vmatpush1.bf16.msra.mxu0 0
    %84 = vmatprep.mubr.bf16.mxu0 0
    %85 = vmatmul.mubr.bf16.gmra.mrb[0].mxu0 %v50
    %v86 = vpop.f32.mrb[0].mxu0
    %v87 = vadd.f32 %v34, %v86
    %v88 = vpop.f32.mrb[0].mxu0
    %v89 = vpop.f32.mrb[0].mxu0
    %v90 = vadd.f32 %v34, %v89
    %v91 = vpop.f32.mrb[0].mxu0
    %92 = vdwg.mxu0
    %v93 = vmul.f32 %v87, 0.5
    %v94 = vmul.f32 %v90, 0.5
    %v95 = vmul.f32 %v87, %v87
    %v96 = vmul.f32 %v90, %v90
    %v97 = vmul.f32 %v95, %v87
    %v98 = vmul.f32 %v96, %v90
    %v99 = vmul.f32 %v97, 0.044715
    %v100 = vmul.f32 %v98, 0.044715
    %v101 = vadd.f32 %v87, %v99
    %v102 = vadd.f32 %v90, %v100
    %v103 = vmul.f32 %v101, 0.7978846
    %v104 = vmul.f32 %v102, 0.7978846
    %v105 = vtanh.pop %v103
    %v106 = vtanh.pop %v104
    %v107 = vadd.f32 %v105, 1.0
    %v108 = vadd.f32 %v106, 1.0
    %v109 = vmul.f32 %v93, %v107
    %v110 = vmul.f32 %v94, %v108
    %v111 = vpack.c.bf16 %v110, %v109
    %v112 = vld [vmem:[%s3] sm:$0xf]
    %v113 = vld [vmem:[%s4] sm:$0x1]
    %v115 = vlaneseq
    %v116 = vshrl.u32 %v115, 7
    %v117 = vsub.s32 0, %v116
    %v118 = vrot.slane %v113, %v117
    %vm120 = vcmask 64512
    %v122 = vsel %vm120, %v111, 0
    %vm124 = vcmask 1043456
    %v126 = vsel %vm124, %v112, 0
    %128 = vmatprep.subr.bf16.mxu0 0
    %129 = vmatpush1.bf16.msra.mxu0 %v126
    %130 = vmatprep.subr.bf16.mxu0 0
    %131 = vmatpush1.bf16.msra.mxu0 0
    %132 = vmatprep.subr.bf16.mxu0 0
    %133 = vmatpush1.bf16.msra.mxu0 0
    %134 = vmatprep.subr.bf16.mxu0 0
    %135 = vmatpush1.bf16.msra.mxu0 0
    %136 = vmatprep.subr.bf16.mxu0 0
    %137 = vmatpush1.bf16.msra.mxu0 0
    %138 = vmatprep.subr.bf16.mxu0 0
    %139 = vmatpush1.bf16.msra.mxu0 0
    %140 = vmatprep.subr.bf16.mxu0 0
    %141 = vmatpush1.bf16.msra.mxu0 0
    %142 = vmatprep.subr.bf16.mxu0 0
    %143 = vmatpush1.bf16.msra.mxu0 0
    %144 = vmatprep.subr.bf16.mxu0 0
    %145 = vmatpush1.bf16.msra.mxu0 0
    %146 = vmatprep.subr.bf16.mxu0 0
    %147 = vmatpush1.bf16.msra.mxu0 0
    %148 = vmatprep.subr.bf16.mxu0 0
    %149 = vmatpush1.bf16.msra.mxu0 0
    %150 = vmatprep.subr.bf16.mxu0 0
    %151 = vmatpush1.bf16.msra.mxu0 0
    %152 = vmatprep.subr.bf16.mxu0 0
    %153 = vmatpush1.bf16.msra.mxu0 0
    %154 = vmatprep.subr.bf16.mxu0 0
    %155 = vmatpush1.bf16.msra.mxu0 0
    %156 = vmatprep.subr.bf16.mxu0 0
    %157 = vmatpush1.bf16.msra.mxu0 0
    %158 = vmatprep.subr.bf16.mxu0 0
    %159 = vmatpush1.bf16.msra.mxu0 0
    %160 = vmatprep.mubr.bf16.mxu0 0
    %161 = vmatmul.mubr.bf16.gmra.mrb[0].mxu0 %v122
    %v162 = vpop.f32.mrb[0].mxu0
    %v163 = vadd.f32 %v118, %v162
    %v164 = vpop.f32.mrb[0].mxu0
    %v165 = vpop.f32.mrb[0].mxu0
    %v166 = vadd.f32 %v118, %v165
    %v167 = vpop.f32.mrb[0].mxu0
    %168 = vdwg.mxu0
    %169 = vst.msk [vmem:[#allocation2] sm:$0xff] %vm48, %v163
    %170 = vst.msk [vmem:[#allocation2 + $0x8] sm:$0xff] %vm48, %v166
    // Predicated region
    $region22: #{_adapter_call.1} parent=1 // pred_check
      _
    $region23: #{_adapter_call.1} parent=1 // pred_check_branch
      %172 = sbr.rel (0) target = $region25
    $region24: #{_adapter_call.1} parent=1 // pred_region
      %s174 = ssub.s32 256, 256
      %175 = vsyncadd [#allocation3], %s174
      %s176 = sshll.u32 [#allocation2], 4
      %s177 = int_to_ptr.vmem [resolvable:$true] %s176
      %182 = dma.vmem_to_hbm [thread:$0]  %s177, 256, %s5, [#allocation3], 128, 128, 8
    $region25: #{_adapter_call.1} parent=1 // pred_fallthru
      _
    // Predicated region
    $region26: #{_adapter_call.1} parent=1 // pred_check
      _
    $region27: #{_adapter_call.1} parent=1 // pred_check_branch
      %184 = sbr.rel (0) target = $region29
    $region28: #{_adapter_call.1} parent=1 // pred_region
      %185 = dma.done [#allocation3], 256
    $region29: #{_adapter_call.1} parent=1 // pred_fallthru
      _
    %186 = vsyncpa [#allocation3], 1

</llo_original>
